<compile_context>
chip_gen: v7x
topology: tpu7x:2x2x1
jax: 0.10.0
libtpu: 0.0.40
codegen_flags: <defaults>
</compile_context>

<pallas_src>
import functools
from typing import NamedTuple

import jax
import jax.numpy as jnp
from jax.experimental import pallas as pl
from jax.experimental.pallas import tpu as pltpu


def _round_up(x: int, m: int) -> int:
    return (x + m - 1) // m * m


# ----------------------------- kernel bodies -----------------------------

def _linear_kernel_single_k(x_ref, w_ref, b_ref, o_ref):
    # Whole reduction fits in one K step: no accumulator needed.
    o_ref[...] = (
        jnp.dot(x_ref[...], w_ref[...], preferred_element_type=jnp.float32)
        + b_ref[...]
    ).astype(o_ref.dtype)


def _linear_kernel_inplace(x_ref, w_ref, b_ref, o_ref):
    # f32 output: accumulate directly into the K-resident output block
    # (output index_map ignores k), saving the scratch + finalize copy.
    k = pl.program_id(2)

    @pl.when(k == 0)
    def _():
        o_ref[...] = jnp.broadcast_to(b_ref[...], o_ref.shape)

    o_ref[...] += jnp.dot(x_ref[...], w_ref[...], preferred_element_type=jnp.float32)


def _linear_kernel_scratch(x_ref, w_ref, b_ref, o_ref, acc_ref):
    # General path: f32 VMEM accumulator; bias add + downcast fused into finalize.
    k = pl.program_id(2)

    @pl.when(k == 0)
    def _():
        acc_ref[...] = jnp.zeros_like(acc_ref)

    acc_ref[...] += jnp.dot(x_ref[...], w_ref[...], preferred_element_type=jnp.float32)

    @pl.when(k == pl.num_programs(2) - 1)
    def _():
        o_ref[...] = (acc_ref[...] + b_ref[...]).astype(o_ref.dtype)


# ------------------------- parameter preparation -------------------------

class LinearParams(NamedTuple):
    """Pre-prepared nn.Linear params. Pass via closure/partial when jitting
    (the int fields are Python statics used for grid/tile construction)."""
    w_t: jax.Array       # (Fp, Cp): weight.T, cast to compute dtype, padded
    bias2d: jax.Array    # (1, Cp): float32, padded
    num_features: int    # F (unpadded)
    num_classes: int     # C (unpadded)
    tile_n: int
    tile_k: int


def _plan_nk(F, C, tile_n, tile_k):
    tn = min(tile_n, _round_up(C, 128))
    tk = min(tile_k, _round_up(F, 128))
    # v7x megacore: grid-M is usually 1, so keep >=2 blocks along N when the
    # class dim allows it, so both TensorCores get work.
    c128 = _round_up(C, 128)
    if c128 // tn < 2 and c128 >= 256:
        tn = _round_up(c128 // 2, 128)
    return tn, tk


def prepare_params(weight, bias, *, compute_dtype=None, tile_n=1024, tile_k=2048):
    """One-time (hoisted) weight/bias prep -- do NOT call per forward pass.

    weight: (C, F) in PyTorch nn.Linear layout; bias: (C,).
    compute_dtype: e.g. jnp.bfloat16 -- fine on v5e/v6e/v7x (bf16-native MXU
    everywhere; the bias add stays in f32).  On v7x, fp8 (not int8) is the
    further-compression option.
    """
    weight = jnp.asarray(weight)
    bias = jnp.asarray(bias)
    C, F = weight.shape
    tn, tk = _plan_nk(F, C, tile_n, tile_k)
    Fp, Cp = _round_up(F, tk), _round_up(C, tn)

    w_t = weight.T
    if compute_dtype is not None:
        w_t = w_t.astype(compute_dtype)
    if (Fp, Cp) != (F, C):
        w_t = jnp.pad(w_t, ((0, Fp - F), (0, Cp - C)))
    b2d = jnp.pad(bias.astype(jnp.float32), (0, Cp - C)).reshape(1, Cp)
    return LinearParams(w_t, b2d, F, C, tn, tk)


# ------------------------------- forward --------------------------------

def _pick_tile_m(B: int, cap: int) -> int:
    padded = _round_up(B, 8)
    if padded <= cap:
        return padded  # single M tile: weight streamed from HBM exactly once
    for cand in (cap, cap // 2, cap // 4, cap // 8):
        if cand >= 128 and (_round_up(B, cand) - B) * 8 <= B:  # <12.5% pad waste
            return cand
    return 128


def linear_forward(x, params: LinearParams, *, tile_m: int = 1024,
                   vmem_limit_bytes=None):
    """z = x @ weight.T + bias using pre-prepared params. Returns (B, C) in x.dtype."""
    B, F = x.shape
    assert F == params.num_features, "feature dims must match"
    C = params.num_classes
    out_dtype = x.dtype

    w_t, b2d = params.w_t, params.bias2d
    Fp, Cp = w_t.shape
    tn, tk = params.tile_n, params.tile_k

    if x.dtype != w_t.dtype:
        x = x.astype(w_t.dtype)  # cheap; fused into kernel input (allow_input_fusion)

    tm = _pick_tile_m(B, tile_m)
    Bp = _round_up(B, tm)
    if (Bp, Fp) != (B, F):
        x = jnp.pad(x, ((0, Bp - B), (0, Fp - F)))

    grid = (Bp // tm, Cp // tn, Fp // tk)
    grid_k = grid[2]

    if grid_k == 1:
        kernel = _linear_kernel_single_k
        scratch_shapes = []
    elif jnp.dtype(out_dtype) == jnp.float32:
        kernel = _linear_kernel_inplace
        scratch_shapes = []
    else:
        kernel = _linear_kernel_scratch
        scratch_shapes = [pltpu.VMEM((tm, tn), jnp.float32)]

    x_b = jnp.dtype(x.dtype).itemsize
    w_b = jnp.dtype(w_t.dtype).itemsize
    o_b = jnp.dtype(out_dtype).itemsize

    if vmem_limit_bytes is None:
        # Actual double-buffered footprint (+ slack).  With the default tile plan
        # this stays well under v7x's 64 MiB per-TC VMEM.
        footprint = 2 * (tm * tk * x_b + tk * tn * w_b + tn * 4 + tm * tn * o_b)
        if scratch_shapes:
            footprint += tm * tn * 4
        vmem_limit_bytes = max(32 << 20, footprint + (8 << 20))

    cost = pl.CostEstimate(
        flops=2 * Bp * Fp * Cp,
        transcendentals=0,
        bytes_accessed=(Bp * Fp * x_b
                        + grid[0] * Fp * Cp * w_b   # weight re-streamed per M tile
                        + Bp * Cp * o_b
                        + Cp * 4),
    )

    out = pl.pallas_call(
        kernel,
        out_shape=jax.ShapeDtypeStruct((Bp, Cp), out_dtype),
        grid_spec=pltpu.PrefetchScalarGridSpec(
            num_scalar_prefetch=0,
            grid=grid,
            in_specs=[
                pl.BlockSpec((tm, tk), lambda i, j, k: (i, k)),   # activations
                pl.BlockSpec((tk, tn), lambda i, j, k: (k, j)),   # weight (F, C)
                pl.BlockSpec((1, tn), lambda i, j, k: (0, j)),    # bias (f32)
            ],
            out_specs=pl.BlockSpec((tm, tn), lambda i, j, k: (i, j)),
            scratch_shapes=scratch_shapes,
        ),
        compiler_params=pltpu.CompilerParams(
            dimension_semantics=("parallel", "parallel", "arbitrary"),
            vmem_limit_bytes=vmem_limit_bytes,
            allow_input_fusion=[True, False, False],
        ),
        cost_estimate=cost,
    )(x, w_t, b2d)

    if (Bp, Cp) != (B, C):
        out = out[:B, :C]
    return out


def init_params(key, num_features, num_classes):
    """Xavier-uniform weight (as in the module's __init__), zero bias."""
    bound = (6.0 / (num_features + num_classes)) ** 0.5
    weight = jax.random.uniform(key, (num_classes, num_features), jnp.float32,
                                minval=-bound, maxval=bound)
    bias = jnp.zeros((num_classes,), jnp.float32)
    return weight, bias


if __name__ == "__main__":
    key = jax.random.PRNGKey(0)
    k_x, k_w, k_x2, k_w2 = jax.random.split(key, 4)

    # --- Test 1: module-sized toy shape, f32 weights (single-K-step kernel) ---
    batch, num_features, num_classes = 8, 32, 16
    x = jax.random.normal(k_x, (batch, num_features), jnp.float32)
    weight, bias = init_params(k_w, num_features, num_classes)
    z_ref = x @ weight.T + bias   # JAX/TPU reference (same MXU default precision)

    params_f32 = prepare_params(weight, bias)          # hoisted one-time prep
    fwd = jax.jit(functools.partial(linear_forward, params=params_f32))
    z = jax.block_until_ready(fwd(x))
    assert z.shape == (batch, num_classes)
    assert jnp.allclose(z, z_ref, atol=2e-2, rtol=2e-2), "f32 path mismatch"

    # --- Test 1b: bf16 compute (valid on v5e/v6e/v7x), f32 output ---
    params_bf16 = prepare_params(weight, bias, compute_dtype=jnp.bfloat16)
    z_bf16 = jax.block_until_ready(linear_forward(x, params_bf16))
    assert z_bf16.shape == (batch, num_classes)
    assert jnp.allclose(z_bf16, z_ref, atol=1e-1, rtol=1e-1), "bf16 path mismatch"

    # --- Test 2: multi-K-step paths (tile_k forced small), ragged class dim ---
    B2, F2, C2 = 16, 384, 40
    x2 = jax.random.normal(k_x2, (B2, F2), jnp.float32)
    w2, b2 = init_params(k_w2, F2, C2)
    z2_ref = x2 @ w2.T + b2

    # f32 output -> in-place output accumulation kernel (no scratch).
    p2 = prepare_params(w2, b2, tile_n=128, tile_k=128)
    z2 = jax.block_until_ready(linear_forward(x2, p2))
    assert z2.shape == (B2, C2)
    assert jnp.allclose(z2, z2_ref, atol=5e-2, rtol=5e-2), "multi-K f32 mismatch"

    # bf16 activations + bf16 output -> scratch-accumulator kernel.
    p2b = prepare_params(w2, b2, compute_dtype=jnp.bfloat16, tile_n=128, tile_k=128)
    z2b = jax.block_until_ready(linear_forward(x2.astype(jnp.bfloat16), p2b))
    assert z2b.shape == (B2, C2)
    assert jnp.allclose(z2b.astype(jnp.float32), z2_ref, atol=2e-1, rtol=2e-1), \
        "multi-K bf16 mismatch"

    print("KERNEL_OK")
</pallas_src>

<mosaic_0001>
module attributes {stable_mosaic.version = 11 : i64} {
  func.func @_linear_kernel_single_k(%arg0: i32, %arg1: i32, %arg2: i32, %arg3: memref<8x128xf32, #tpu.memory_space<vmem>>, %arg4: memref<128x128xf32, #tpu.memory_space<vmem>>, %arg5: memref<1x128xf32, #tpu.memory_space<vmem>>, %arg6: memref<8x128xf32, #tpu.memory_space<vmem>>) attributes {dimension_semantics = [#tpu.dimension_semantics<parallel>, #tpu.dimension_semantics<parallel>, #tpu.dimension_semantics<arbitrary>], iteration_bounds = array<i64: 1, 1, 1>, scalar_prefetch = 0 : i64, scratch_operands = 0 : i64, tpu.core_type = #tpu.core_type<tc>, window_params = [{transform_indices = @transform_0, window_bounds = array<i64: 8, 128>}, {transform_indices = @transform_1, window_bounds = array<i64: 128, 128>}, {transform_indices = @transform_2, window_bounds = array<i64: 1, 128>}, {transform_indices = @transform_3, window_bounds = array<i64: 8, 128>}]} {
    %c0 = arith.constant 0 : index
    %c0_0 = arith.constant 0 : index
    %0 = vector.load %arg3[%c0, %c0_0] : memref<8x128xf32, #tpu.memory_space<vmem>>, vector<8x128xf32>
    %c0_1 = arith.constant 0 : index
    %c0_2 = arith.constant 0 : index
    %1 = vector.load %arg4[%c0_1, %c0_2] : memref<128x128xf32, #tpu.memory_space<vmem>>, vector<128x128xf32>
    %cst = arith.constant dense<0.000000e+00> : vector<8x128xf32>
    %2 = tpu.matmul %0, %1, %cst {dimension_numbers = #tpu.dot_dimension_numbers<[1], [0], [0], [1], [0, 0, 1, 1], [], []>} : vector<8x128xf32>, vector<128x128xf32>, vector<8x128xf32> -> vector<8x128xf32>
    %c0_3 = arith.constant 0 : index
    %c0_4 = arith.constant 0 : index
    %3 = vector.load %arg5[%c0_3, %c0_4] : memref<1x128xf32, #tpu.memory_space<vmem>>, vector<1x128xf32>
    %4 = vector.broadcast %3 : vector<1x128xf32> to vector<8x128xf32>
    %5 = arith.addf %2, %4 : vector<8x128xf32>
    %c0_5 = arith.constant 0 : index
    %c0_6 = arith.constant 0 : index
    %6 = vector.load %arg6[%c0_5, %c0_6] : memref<8x128xf32, #tpu.memory_space<vmem>>, vector<8x128xf32>
    tpu.vector_store %arg6[%c0_5, %c0_6], %5 {strides = array<i32>} : memref<8x128xf32, #tpu.memory_space<vmem>>, vector<8x128xf32>,
    return
  }
  func.func @transform_0(%arg0: i32, %arg1: i32, %arg2: i32) -> (i32, i32) {
    %c0_i32 = arith.constant 0 : i32
    return %arg0, %arg2 : i32, i32
  }
  func.func @transform_1(%arg0: i32, %arg1: i32, %arg2: i32) -> (i32, i32) {
    %c0_i32 = arith.constant 0 : i32
    return %arg2, %arg1 : i32, i32
  }
  func.func @transform_2(%arg0: i32, %arg1: i32, %arg2: i32) -> (i32, i32) {
    %c0_i32 = arith.constant 0 : i32
    %c0_i32_0 = arith.constant 0 : i32
    return %c0_i32, %arg1 : i32, i32
  }
  func.func @transform_3(%arg0: i32, %arg1: i32, %arg2: i32) -> (i32, i32) {
    %c0_i32 = arith.constant 0 : i32
    return %arg0, %arg1 : i32, i32
  }
}

</mosaic_0001>

<llo_original>
// kernel: linear_forward.2
$region0: #{linear_forward.2}
  #allocation0 [shape = 'u32[]', space=smem, size = 0x4, offset = 0x4, fixed_abs, tag = 'smem constant byte address 0x4 - core index']
  #allocation1 [shape = 'u32[144,128]{1,0:T(1,128)}', space=vmem, size = 0x12000, scoped, tag = 'internal scratch']
  #allocation2 [shape = 'u32[2048]{0}', space=vmem, size = 0x2000, scoped, tag = 'scoped memory for linear_forward.2']
  #allocation3 [shape = 'u32[2048]{0}', space=vmem, size = 0x2000, scoped, tag = 'scoped memory for linear_forward.2']
  #allocation4 [shape = 'u32[2048]{0}', space=vmem, size = 0x2000, scoped, tag = 'scoped memory for linear_forward.2']
  #allocation5 [shape = 'u32[2048]{0}', space=vmem, size = 0x2000, scoped, tag = 'scoped memory for linear_forward.2']
  #allocation6 [shape = 'u32[2048]{0}', space=vmem, size = 0x2000, scoped, tag = 'scoped memory for linear_forward.2']
  %s0 = inlined_call_operand.hbm [shape: f32[128,128], index: 0, kind: input, shape index: {}]
  %s1 = inlined_call_operand.vmem [shape: f32[1,128], index: 1, kind: input, shape index: {}]
  %s2 = inlined_call_operand.hbm [shape: f32[8,32], index: 2, kind: input, shape index: {}]
  %s3 = inlined_call_operand.<no memory space> [shape: f32[], index: 3, kind: input, shape index: {}]
  %s4 = inlined_call_operand.hbm [shape: f32[8,128], index: 4, kind: output, shape index: {}]
  %s5 = sld [smem:[#allocation0]]
  $region30: #{linear_forward.2} parent=0
    _
  %s7 = ssub.s32 1, %s5
  %s8 = scalar_select 0, %s7, %s5
  %v9 = vstv %s3
  $region1: #{linear_forward.2} parent=0
    #allocation7 [shape = 'u8[4096]{0}', space=vmem, size = 0x1000, scoped, tag = 'operand span for operand 2']
    #allocation8 [shape = 's32[1]{0}', space=sflag, size = 0x4, scoped, tag = 'scoped memory for linear_forward.2']
    #allocation9 [shape = 's32[1]{0}', space=sflag, size = 0x4, scoped, tag = 'scoped memory for linear_forward.2']
    #allocation10 [shape = 'u8[65536]{0}', space=vmem, size = 0x10000, scoped, tag = 'input window, operand 1, single buffered']
    #allocation11 [shape = 's32[1]{0}', space=sflag, size = 0x4, scoped, tag = 'scoped memory for linear_forward.2']
    #allocation12 [shape = 'u8[4096]{0}', space=vmem, size = 0x1000, scoped, tag = 'output window, operand 0, single buffered']
    #allocation13 [shape = 'u8[4096]{0}', space=vmem, size = 0x1000, dematerialized = true, scoped, tag = 'FusionAdapter Buffer %fusion.1 = f32[8,128]{1,0:T(8,128)} fusion(%param_2.1, %param_3), kind=kLoop, calls=%fused_computation.1.clone, metadata={op_name="jit(linear_forward)/jit(_pad)/pad" stack_frame_id=1}']
    %10 = vsyncpa [#allocation8], 0
    %11 = vsyncpa [#allocation11], 0
    %12 = vsyncpa [#allocation9], 0
    // Predicated region
    $region2: #{linear_forward.2} parent=1 // pred_check
      _
    $region3: #{linear_forward.2} parent=1 // pred_check_branch
      %14 = sbr.rel (0) target = $region5
    $region4: #{linear_forward.2} parent=1 // pred_region
      %s16 = ssub.s32 128, 128
      %17 = vsyncadd [#allocation8], %s16
      %s19 = sshll.u32 [#allocation7], 4
      %s20 = int_to_ptr.vmem [resolvable:$true] %s19
      %22 = dma.hbm_to_vmem [thread:$0]  %s2, 128, %s20, [#allocation8]
    $region5: #{linear_forward.2} parent=1 // pred_fallthru
      _
    // Predicated region
    $region6: #{linear_forward.2} parent=1 // pred_check
      _
    $region7: #{linear_forward.2} parent=1 // pred_check_branch
      %24 = sbr.rel (0) target = $region9
    $region8: #{linear_forward.2} parent=1 // pred_region
      %s26 = ssub.s32 2048, 2048
      %27 = vsyncadd [#allocation11], %s26
      %s28 = sshll.u32 [#allocation10], 4
      %s29 = int_to_ptr.vmem [resolvable:$true] %s28
      %34 = dma.hbm_to_vmem [thread:$0]  %s0, 2048, %s29, [#allocation11], 128, 128, 8
    $region9: #{linear_forward.2} parent=1 // pred_fallthru
      _
    // Predicated region
    $region10: #{linear_forward.2} parent=1 // pred_check
      _
    $region11: #{linear_forward.2} parent=1 // pred_check_branch
      %36 = sbr.rel (0) target = $region13
    $region12: #{linear_forward.2} parent=1 // pred_region
      _
    $region13: #{linear_forward.2} parent=1 // pred_fallthru
      _
    // Predicated region
    $region14: #{linear_forward.2} parent=1 // pred_check
      _
    $region15: #{linear_forward.2} parent=1 // pred_check_branch
      %38 = sbr.rel (0) target = $region17
    $region16: #{linear_forward.2} parent=1 // pred_region
      %39 = dma.done [#allocation8], 128
    $region17: #{linear_forward.2} parent=1 // pred_fallthru
      _
    // Predicated region
    $region18: #{linear_forward.2} parent=1 // pred_check
      _
    $region19: #{linear_forward.2} parent=1 // pred_check_branch
      %41 = sbr.rel (0) target = $region21
    $region20: #{linear_forward.2} parent=1 // pred_region
      %42 = dma.done [#allocation11], 2048
    $region21: #{linear_forward.2} parent=1 // pred_fallthru
      _
    %v43 = vld [vmem:[#allocation7] sm:$0xff]
    %v44 = vlaneseq
    %v45 = vand.u32 %v44, 127
    %vm47 = vcmp.lt.s32.totalorder %v45, 32
    %v48 = vsel %vm47, %v43, %v9
    %50 = vst [vmem:[#allocation13] sm:$0xff] %v48
    %v51 = vld [vmem:[#allocation13] sm:$0xff]
    %v52 = vld [vmem:[#allocation10] sm:$0xff]
    %v53 = vld [vmem:[#allocation10 + $0x8] sm:$0xff]
    %v54 = vld [vmem:[#allocation10 + $0x10] sm:$0xff]
    %v55 = vld [vmem:[#allocation10 + $0x18] sm:$0xff]
    %v56 = vld [vmem:[#allocation10 + $0x20] sm:$0xff]
    %v57 = vld [vmem:[#allocation10 + $0x28] sm:$0xff]
    %v58 = vld [vmem:[#allocation10 + $0x30] sm:$0xff]
    %v59 = vld [vmem:[#allocation10 + $0x38] sm:$0xff]
    %v60 = vld [vmem:[#allocation10 + $0x40] sm:$0xff]
    %v61 = vld [vmem:[#allocation10 + $0x48] sm:$0xff]
    %v62 = vld [vmem:[#allocation10 + $0x50] sm:$0xff]
    %v63 = vld [vmem:[#allocation10 + $0x58] sm:$0xff]
    %v64 = vld [vmem:[#allocation10 + $0x60] sm:$0xff]
    %v65 = vld [vmem:[#allocation10 + $0x68] sm:$0xff]
    %v66 = vld [vmem:[#allocation10 + $0x70] sm:$0xff]
    %v67 = vld [vmem:[#allocation10 + $0x78] sm:$0xff]
    %v68 = vld [vmem:[%s1] sm:$0x1]
    %v70 = vlaneseq
    %v71 = vshrl.u32 %v70, 7
    %v72 = vsub.s32 0, %v71
    %v73 = vrot.slane %v68, %v72
    %75 = vmatprep.subr.mxu0 0.0
    %76 = vmatpush1.msra.mxu0 %v52
    %77 = vmatprep.subr.mxu0 0.0
    %78 = vmatpush1.msra.mxu0 %v53
    %79 = vmatprep.subr.mxu0 0.0
    %80 = vmatpush1.msra.mxu0 %v54
    %81 = vmatprep.subr.mxu0 0.0
    %82 = vmatpush1.msra.mxu0 %v55
    %83 = vmatprep.subr.mxu0 0.0
    %84 = vmatpush1.msra.mxu0 %v56
    %85 = vmatprep.subr.mxu0 0.0
    %86 = vmatpush1.msra.mxu0 %v57
    %87 = vmatprep.subr.mxu0 0.0
    %88 = vmatpush1.msra.mxu0 %v58
    %89 = vmatprep.subr.mxu0 0.0
    %90 = vmatpush1.msra.mxu0 %v59
    %91 = vmatprep.subr.mxu0 0.0
    %92 = vmatpush1.msra.mxu0 %v60
    %93 = vmatprep.subr.mxu0 0.0
    %94 = vmatpush1.msra.mxu0 %v61
    %95 = vmatprep.subr.mxu0 0.0
    %96 = vmatpush1.msra.mxu0 %v62
    %97 = vmatprep.subr.mxu0 0.0
    %98 = vmatpush1.msra.mxu0 %v63
    %99 = vmatprep.subr.mxu0 0.0
    %100 = vmatpush1.msra.mxu0 %v64
    %101 = vmatprep.subr.mxu0 0.0
    %102 = vmatpush1.msra.mxu0 %v65
    %103 = vmatprep.subr.mxu0 0.0
    %104 = vmatpush1.msra.mxu0 %v66
    %105 = vmatprep.subr.mxu0 0.0
    %106 = vmatpush1.msra.mxu0 %v67
    %107 = vmatprep.subr.mxu0 0.0
    %108 = vmatpush1.msra.mxu0 0.0
    %109 = vmatprep.subr.mxu0 0.0
    %110 = vmatpush1.msra.mxu0 0.0
    %111 = vmatprep.subr.mxu0 0.0
    %112 = vmatpush1.msra.mxu0 0.0
    %113 = vmatprep.subr.mxu0 0.0
    %114 = vmatpush1.msra.mxu0 0.0
    %115 = vmatprep.subr.mxu0 0.0
    %116 = vmatpush1.msra.mxu0 0.0
    %117 = vmatprep.subr.mxu0 0.0
    %118 = vmatpush1.msra.mxu0 0.0
    %119 = vmatprep.subr.mxu0 0.0
    %120 = vmatpush1.msra.mxu0 0.0
    %121 = vmatprep.subr.mxu0 0.0
    %122 = vmatpush1.msra.mxu0 0.0
    %123 = vmatprep.subr.mxu0 0.0
    %124 = vmatpush1.msra.mxu0 0.0
    %125 = vmatprep.subr.mxu0 0.0
    %126 = vmatpush1.msra.mxu0 0.0
    %127 = vmatprep.subr.mxu0 0.0
    %128 = vmatpush1.msra.mxu0 0.0
    %129 = vmatprep.subr.mxu0 0.0
    %130 = vmatpush1.msra.mxu0 0.0
    %131 = vmatprep.subr.mxu0 0.0
    %132 = vmatpush1.msra.mxu0 0.0
    %133 = vmatprep.subr.mxu0 0.0
    %134 = vmatpush1.msra.mxu0 0.0
    %135 = vmatprep.subr.mxu0 0.0
    %136 = vmatpush1.msra.mxu0 0.0
    %137 = vmatprep.subr.mxu0 0.0
    %138 = vmatpush1.msra.mxu0 0.0
    %139 = vmatprep.mubr.f32.mxu0 0.0
    %140 = vmatmul.mubr.f32.gmra.mrb[0].mxu0 %v51
    %v141 = vpop.f32.mrb[0].mxu0
    %v142 = vadd.f32 %v73, %v141
    %v143 = vpop.f32.mrb[0].mxu0
    %144 = vdwg.mxu0
    %145 = vst [vmem:[#allocation12] sm:$0xff] %v142
    // Predicated region
    $region22: #{linear_forward.2} parent=1 // pred_check
      _
    $region23: #{linear_forward.2} parent=1 // pred_check_branch
      %147 = sbr.rel (0) target = $region25
    $region24: #{linear_forward.2} parent=1 // pred_region
      %s149 = ssub.s32 128, 128
      %150 = vsyncadd [#allocation9], %s149
      %s152 = sshll.u32 [#allocation12], 4
      %s153 = int_to_ptr.vmem [resolvable:$true] %s152
      %155 = dma.vmem_to_hbm [thread:$0]  %s153, 128, %s4, [#allocation9]
    $region25: #{linear_forward.2} parent=1 // pred_fallthru
      _
    // Predicated region
    $region26: #{linear_forward.2} parent=1 // pred_check
      _
    $region27: #{linear_forward.2} parent=1 // pred_check_branch
      %157 = sbr.rel (0) target = $region29
    $region28: #{linear_forward.2} parent=1 // pred_region
      %158 = dma.done [#allocation9], 128
    $region29: #{linear_forward.2} parent=1 // pred_fallthru
      _
    %159 = vsyncpa [#allocation8], 1
    %160 = vsyncpa [#allocation11], 1
    %161 = vsyncpa [#allocation9], 1

</llo_original>
